<compile_context>
chip_gen: v7x
topology: tpu7x:2x2x1
jax: 0.10.0
libtpu: 0.0.40
codegen_flags: <defaults>
</compile_context>

<pallas_src>
import jax
import jax.numpy as jnp
from jax.experimental import pallas as pl
from jax.experimental.pallas import tpu as pltpu

# ---- model dims (small, synthetic) -----------------------------------------
N_MELS = 32          # mel bins fed to the encoder
ENC_DIM = 32         # mel_spectrogram_encoder output dim
DEC_DIM = 32         # phoneme_decoder output dim == PRN_CLF_IN_DIM
OUT_DIM = 48         # PRN_CLF_OUT_DIM (number of phoneme classes)

TM_MAX = 4096        # max row tile (amortizes grid-step overhead; ~2.5 MiB
                     # double-buffered VMEM -> fits every generation)


def _row_tile(n):
    """Pick a row tile: cap at TM_MAX, prefer >=2 grid steps (v7x megacore)."""
    if n <= 8:
        return n                                   # one tiny block == full dim
    if n >= 2 * TM_MAX:
        return TM_MAX
    # split roughly in half, rounded up to a sublane multiple of 8
    return min(n, (((n + 1) // 2) + 7) // 8 * 8)


def _prn_kernel(x_ref,
                w_enc_ref, b_enc_ref,
                w_dec_ref, b_dec_ref,
                w_clf_ref, b_clf_ref,
                o_ref):
    """Fused forward: relu(x@We+be) -> relu(.@Wd+bd) -> .@Wc+bc.

    Matmul operands are bf16 (cast in-kernel), accumulation + elementwise
    math stay f32; output stored 48-wide f32.
    """
    x = x_ref[...].astype(jnp.bfloat16)                     # (TM, 32)

    # mel_spectrogram_encoder: Linear(N_MELS -> ENC_DIM) + ReLU
    h = jnp.dot(x, w_enc_ref[...], preferred_element_type=jnp.float32)
    h = jnp.maximum(h + b_enc_ref[...], 0.0)                # f32 VPU work

    # phoneme_decoder: Linear(ENC_DIM -> DEC_DIM) + ReLU
    h = jnp.dot(h.astype(jnp.bfloat16), w_dec_ref[...],
                preferred_element_type=jnp.float32)
    h = jnp.maximum(h + b_dec_ref[...], 0.0)

    # classification_head: Linear(DEC_DIM -> OUT_DIM)  (no activation)
    y = jnp.dot(h.astype(jnp.bfloat16), w_clf_ref[...],
                preferred_element_type=jnp.float32)
    o_ref[...] = (y + b_clf_ref[...]).astype(o_ref.dtype)


@jax.jit
def phoneme_recognition_network(x, params):
    """x: [B, T, N_MELS] float32 -> logits [B, T, OUT_DIM] float32."""
    B, T, F = x.shape
    assert F == N_MELS
    N = B * T

    w_enc, b_enc, w_dec, b_dec, w_clf, b_clf = params

    # ---- wrapper-side layout prep (no full-array passes over x) -------------
    x2d = x.reshape(N, F)                       # stays f32; cast happens in-kernel

    # bf16 matmul operands (tiny); biases stay f32 (added post-accumulation).
    w_enc_b = w_enc.astype(jnp.bfloat16)
    w_dec_b = w_dec.astype(jnp.bfloat16)
    w_clf_b = w_clf.astype(jnp.bfloat16)
    b_enc_f = b_enc.astype(jnp.float32)
    b_dec_f = b_dec.astype(jnp.float32)
    b_clf_f = b_clf.astype(jnp.float32)

    tm = _row_tile(N)
    grid = (pl.cdiv(N, tm),)                    # ragged tail masked by Pallas

    row_in_spec = pl.BlockSpec((tm, F), lambda i: (i, 0))
    full = lambda shape: pl.BlockSpec(shape, lambda i: (0, 0))  # grid-resident

    mm_params = N_MELS * ENC_DIM + ENC_DIM * DEC_DIM + DEC_DIM * OUT_DIM
    flops = 2 * N * mm_params
    bytes_accessed = (N * (N_MELS * 4 + OUT_DIM * 4)         # x in f32, y out f32
                      + 2 * mm_params                        # bf16 weights
                      + 4 * (ENC_DIM + DEC_DIM + OUT_DIM))   # f32 biases

    out = pl.pallas_call(
        _prn_kernel,
        out_shape=jax.ShapeDtypeStruct((N, OUT_DIM), jnp.float32),
        grid_spec=pl.GridSpec(
            grid=grid,
            in_specs=[
                row_in_spec,
                full((N_MELS, ENC_DIM)), full((1, ENC_DIM)),
                full((ENC_DIM, DEC_DIM)), full((1, DEC_DIM)),
                full((DEC_DIM, OUT_DIM)), full((1, OUT_DIM)),
            ],
            out_specs=pl.BlockSpec((tm, OUT_DIM), lambda i: (i, 0)),
        ),
        compiler_params=pltpu.CompilerParams(
            dimension_semantics=("parallel",)),   # shards rows across TCs (v7x)
        cost_estimate=pl.CostEstimate(
            flops=flops, transcendentals=0, bytes_accessed=bytes_accessed),
    )(x2d, w_enc_b, b_enc_f, w_dec_b, b_dec_f, w_clf_b, b_clf_f)

    return out.reshape(B, T, OUT_DIM)


def init_params(key):
    """Deterministic parameter init (Linear weights stored as [in, out])."""
    ks = jax.random.split(key, 6)
    scale = 0.05
    w_enc = scale * jax.random.normal(ks[0], (N_MELS, ENC_DIM), jnp.float32)
    b_enc = scale * jax.random.normal(ks[1], (1, ENC_DIM), jnp.float32)
    w_dec = scale * jax.random.normal(ks[2], (ENC_DIM, DEC_DIM), jnp.float32)
    b_dec = scale * jax.random.normal(ks[3], (1, DEC_DIM), jnp.float32)
    w_clf = scale * jax.random.normal(ks[4], (DEC_DIM, OUT_DIM), jnp.float32)
    b_clf = scale * jax.random.normal(ks[5], (1, OUT_DIM), jnp.float32)
    return (w_enc, b_enc, w_dec, b_dec, w_clf, b_clf)


def _reference(x, params):
    """Pure-JAX f32 reference identical to the torch forward pass."""
    w_enc, b_enc, w_dec, b_dec, w_clf, b_clf = params
    h = jnp.maximum(x @ w_enc + b_enc[0], 0.0)
    h = jnp.maximum(h @ w_dec + b_dec[0], 0.0)
    return h @ w_clf + b_clf[0]


if __name__ == "__main__":
    key = jax.random.PRNGKey(0)
    kx, kp = jax.random.split(key)

    B, T = 2, 8  # batch=2, seq=8 frames -> N=16 rows, tile=8, grid=2
    x = jax.random.normal(kx, (B, T, N_MELS), jnp.float32)
    params = init_params(kp)

    out = phoneme_recognition_network(x, params)
    out = jax.block_until_ready(out)

    ref = _reference(x, params)
    assert out.shape == (B, T, OUT_DIM)
    # bf16 matmul operands -> relaxed tolerance vs f32 reference.
    assert jnp.allclose(out, ref, atol=3e-2, rtol=3e-2), "mismatch vs reference"

    # TODO(synk): the real mel_spectrogram_encoder / phoneme_decoder are
    # dependency-injected in the torch module and unspecified; modeled here as
    # Linear+ReLU projections.
    print("KERNEL_OK")
</pallas_src>

<mosaic_0001>
module attributes {stable_mosaic.version = 11 : i64} {
  func.func @_prn_kernel(%arg0: i32, %arg1: memref<8x32xf32, #tpu.memory_space<vmem>>, %arg2: memref<32x32xbf16, #tpu.memory_space<vmem>>, %arg3: memref<1x32xf32, #tpu.memory_space<vmem>>, %arg4: memref<32x32xbf16, #tpu.memory_space<vmem>>, %arg5: memref<1x32xf32, #tpu.memory_space<vmem>>, %arg6: memref<32x48xbf16, #tpu.memory_space<vmem>>, %arg7: memref<1x48xf32, #tpu.memory_space<vmem>>, %arg8: memref<8x48xf32, #tpu.memory_space<vmem>>) attributes {dimension_semantics = [#tpu.dimension_semantics<parallel>], iteration_bounds = array<i64: 2>, scalar_prefetch = 0 : i64, scratch_operands = 0 : i64, tpu.core_type = #tpu.core_type<tc>, window_params = [{transform_indices = @transform_0, window_bounds = array<i64: 8, 32>}, {pipeline_mode = #tpu.pipeline_mode<synchronous>, transform_indices = @transform_1, window_bounds = array<i64: 32, 32>}, {pipeline_mode = #tpu.pipeline_mode<synchronous>, transform_indices = @transform_2, window_bounds = array<i64: 1, 32>}, {pipeline_mode = #tpu.pipeline_mode<synchronous>, transform_indices = @transform_3, window_bounds = array<i64: 32, 32>}, {pipeline_mode = #tpu.pipeline_mode<synchronous>, transform_indices = @transform_4, window_bounds = array<i64: 1, 32>}, {pipeline_mode = #tpu.pipeline_mode<synchronous>, transform_indices = @transform_5, window_bounds = array<i64: 32, 48>}, {pipeline_mode = #tpu.pipeline_mode<synchronous>, transform_indices = @transform_6, window_bounds = array<i64: 1, 48>}, {transform_indices = @transform_7, window_bounds = array<i64: 8, 48>}]} {
    %c0 = arith.constant 0 : index
    %c0_0 = arith.constant 0 : index
    %0 = vector.load %arg1[%c0, %c0_0] : memref<8x32xf32, #tpu.memory_space<vmem>>, vector<8x32xf32>
    %1 = arith.truncf %0 : vector<8x32xf32> to vector<8x32xbf16>
    %c0_1 = arith.constant 0 : index
    %c0_2 = arith.constant 0 : index
    %2 = vector.load %arg2[%c0_1, %c0_2] : memref<32x32xbf16, #tpu.memory_space<vmem>>, vector<32x32xbf16>
    %cst = arith.constant dense<0.000000e+00> : vector<8x32xf32>
    %3 = tpu.matmul %1, %2, %cst {dimension_numbers = #tpu.dot_dimension_numbers<[1], [0], [0], [1], [0, 0, 1, 1], [], []>} : vector<8x32xbf16>, vector<32x32xbf16>, vector<8x32xf32> -> vector<8x32xf32>
    %c0_3 = arith.constant 0 : index
    %c0_4 = arith.constant 0 : index
    %4 = vector.load %arg3[%c0_3, %c0_4] : memref<1x32xf32, #tpu.memory_space<vmem>>, vector<1x32xf32>
    %5 = vector.broadcast %4 : vector<1x32xf32> to vector<8x32xf32>
    %6 = arith.addf %3, %5 : vector<8x32xf32>
    %cst_5 = arith.constant 0.000000e+00 : f32
    %7 = vector.broadcast %cst_5 : f32 to vector<8x32xf32>
    %8 = arith.maximumf %6, %7 : vector<8x32xf32>
    %9 = arith.truncf %8 : vector<8x32xf32> to vector<8x32xbf16>
    %c0_6 = arith.constant 0 : index
    %c0_7 = arith.constant 0 : index
    %10 = vector.load %arg4[%c0_6, %c0_7] : memref<32x32xbf16, #tpu.memory_space<vmem>>, vector<32x32xbf16>
    %cst_8 = arith.constant dense<0.000000e+00> : vector<8x32xf32>
    %11 = tpu.matmul %9, %10, %cst_8 {dimension_numbers = #tpu.dot_dimension_numbers<[1], [0], [0], [1], [0, 0, 1, 1], [], []>} : vector<8x32xbf16>, vector<32x32xbf16>, vector<8x32xf32> -> vector<8x32xf32>
    %c0_9 = arith.constant 0 : index
    %c0_10 = arith.constant 0 : index
    %12 = vector.load %arg5[%c0_9, %c0_10] : memref<1x32xf32, #tpu.memory_space<vmem>>, vector<1x32xf32>
    %13 = vector.broadcast %12 : vector<1x32xf32> to vector<8x32xf32>
    %14 = arith.addf %11, %13 : vector<8x32xf32>
    %cst_11 = arith.constant 0.000000e+00 : f32
    %15 = vector.broadcast %cst_11 : f32 to vector<8x32xf32>
    %16 = arith.maximumf %14, %15 : vector<8x32xf32>
    %17 = arith.truncf %16 : vector<8x32xf32> to vector<8x32xbf16>
    %c0_12 = arith.constant 0 : index
    %c0_13 = arith.constant 0 : index
    %18 = vector.load %arg6[%c0_12, %c0_13] : memref<32x48xbf16, #tpu.memory_space<vmem>>, vector<32x48xbf16>
    %cst_14 = arith.constant dense<0.000000e+00> : vector<8x48xf32>
    %19 = tpu.matmul %17, %18, %cst_14 {dimension_numbers = #tpu.dot_dimension_numbers<[1], [0], [0], [1], [0, 0, 1, 1], [], []>} : vector<8x32xbf16>, vector<32x48xbf16>, vector<8x48xf32> -> vector<8x48xf32>
    %c0_15 = arith.constant 0 : index
    %c0_16 = arith.constant 0 : index
    %20 = vector.load %arg7[%c0_15, %c0_16] : memref<1x48xf32, #tpu.memory_space<vmem>>, vector<1x48xf32>
    %21 = vector.broadcast %20 : vector<1x48xf32> to vector<8x48xf32>
    %22 = arith.addf %19, %21 : vector<8x48xf32>
    %c0_17 = arith.constant 0 : index
    %c0_18 = arith.constant 0 : index
    %23 = vector.load %arg8[%c0_17, %c0_18] : memref<8x48xf32, #tpu.memory_space<vmem>>, vector<8x48xf32>
    tpu.vector_store %arg8[%c0_17, %c0_18], %22 {strides = array<i32>} : memref<8x48xf32, #tpu.memory_space<vmem>>, vector<8x48xf32>,
    return
  }
  func.func @transform_0(%arg0: i32) -> (i32, i32) {
    %c0_i32 = arith.constant 0 : i32
    %c0_i32_0 = arith.constant 0 : i32
    return %arg0, %c0_i32 : i32, i32
  }
  func.func @transform_1(%arg0: i32) -> (i32, i32) {
    %c0_i32 = arith.constant 0 : i32
    %c0_i32_0 = arith.constant 0 : i32
    %c0_i32_1 = arith.constant 0 : i32
    return %c0_i32, %c0_i32_0 : i32, i32
  }
  func.func @transform_2(%arg0: i32) -> (i32, i32) {
    %c0_i32 = arith.constant 0 : i32
    %c0_i32_0 = arith.constant 0 : i32
    %c0_i32_1 = arith.constant 0 : i32
    return %c0_i32, %c0_i32_0 : i32, i32
  }
  func.func @transform_3(%arg0: i32) -> (i32, i32) {
    %c0_i32 = arith.constant 0 : i32
    %c0_i32_0 = arith.constant 0 : i32
    %c0_i32_1 = arith.constant 0 : i32
    return %c0_i32, %c0_i32_0 : i32, i32
  }
  func.func @transform_4(%arg0: i32) -> (i32, i32) {
    %c0_i32 = arith.constant 0 : i32
    %c0_i32_0 = arith.constant 0 : i32
    %c0_i32_1 = arith.constant 0 : i32
    return %c0_i32, %c0_i32_0 : i32, i32
  }
  func.func @transform_5(%arg0: i32) -> (i32, i32) {
    %c0_i32 = arith.constant 0 : i32
    %c0_i32_0 = arith.constant 0 : i32
    %c0_i32_1 = arith.constant 0 : i32
    return %c0_i32, %c0_i32_0 : i32, i32
  }
  func.func @transform_6(%arg0: i32) -> (i32, i32) {
    %c0_i32 = arith.constant 0 : i32
    %c0_i32_0 = arith.constant 0 : i32
    %c0_i32_1 = arith.constant 0 : i32
    return %c0_i32, %c0_i32_0 : i32, i32
  }
  func.func @transform_7(%arg0: i32) -> (i32, i32) {
    %c0_i32 = arith.constant 0 : i32
    %c0_i32_0 = arith.constant 0 : i32
    return %arg0, %c0_i32 : i32, i32
  }
}

</mosaic_0001>

<llo_original>
// kernel: phoneme_recognition_network.1
$region0: #{phoneme_recognition_network.1}
  #allocation0 [shape = 'u32[]', space=smem, size = 0x4, offset = 0x4, fixed_abs, tag = 'smem constant byte address 0x4 - core index']
  #allocation1 [shape = 'u32[144,128]{1,0:T(1,128)}', space=vmem, size = 0x12000, scoped, tag = 'internal scratch']
  %s0 = inlined_call_operand.vmem [shape: f32[16,32], index: 0, kind: input, shape index: {}]
  %s1 = inlined_call_operand.vmem [shape: bf16[32,32], index: 1, kind: input, shape index: {}]
  %s2 = inlined_call_operand.vmem [shape: f32[1,32], index: 2, kind: input, shape index: {}]
  %s3 = inlined_call_operand.vmem [shape: bf16[32,32], index: 3, kind: input, shape index: {}]
  %s4 = inlined_call_operand.vmem [shape: f32[1,32], index: 4, kind: input, shape index: {}]
  %s5 = inlined_call_operand.vmem [shape: bf16[32,48], index: 5, kind: input, shape index: {}]
  %s6 = inlined_call_operand.vmem [shape: f32[1,48], index: 6, kind: input, shape index: {}]
  %s7 = inlined_call_operand.hbm [shape: f32[16,48], index: 7, kind: output, shape index: {}]
  %s8 = sld [smem:[#allocation0]]
  $region61: #{phoneme_recognition_network.1} parent=0
    _
  %s10 = ssub.s32 1, %s8
  %s11 = scalar_select 0, %s10, %s8
  $region1: #{phoneme_recognition_network.1} parent=0
    #allocation2 [shape = 'u8[8192]{0}', space=vmem, size = 0x2000, scoped, tag = 'output window, operand 0']
    #allocation3 [shape = 's32[2]{0}', space=sflag, size = 0x8, scoped, tag = 'scoped memory for phoneme_recognition_network.1']
    %12 = vsyncpa [#allocation3], 0
    %s13 = scalar_lea.sflag [#allocation3], 1
    %14 = vsyncpa %s13, 0
    loop: start=0, step=1, limit=4
    $region2: #{phoneme_recognition_network.1} parent=1 // loop_pre_header
      _
    $region3: #{phoneme_recognition_network.1} parent=1 // loop_header
      %s16 = sphi 0, %s20
      %p17 = scmp.ge.s32.totalorder %s16, 4
      %s26 = sphi 0, %s28
      %s29 = sphi 0, %s26
      %s30 = sphi 0, %s29
      %s46 = sphi 0, %s30
      %s50 = sphi 0, %s50
      %s52 = sphi 0, %s50
      %s53 = sphi 0, %s52
      %s67 = sphi 0, %s53
      %s71 = sphi 0, %s71
      %s73 = sphi 0, %s71
      %s74 = sphi 0, %s73
      %s88 = sphi 0, %s74
      %s92 = sphi 0, %s92
      %s94 = sphi 0, %s92
      %s95 = sphi 0, %s94
      %s109 = sphi 0, %s95
      %s113 = sphi 0, %s113
      %s115 = sphi 0, %s113
      %s116 = sphi 0, %s115
      %s130 = sphi 0, %s116
      %s134 = sphi 0, %s134
      %s136 = sphi 0, %s134
      %s137 = sphi 0, %s136
      %s151 = sphi 0, %s137
      %s155 = sphi 0, %s155
      %s157 = sphi 0, %s155
      %s158 = sphi 0, %s157
      %s172 = sphi 0, %s158
      %s178 = sphi 0, %s180
      %s181 = sphi 0, %s178
      %s182 = sphi 0, %s181
      %s198 = sphi 0, %s182
    $region4: #{phoneme_recognition_network.1} parent=1 // loop_header_branch
      %19 = sbr.rel (%p17) target = $region8
    $region5: #{phoneme_recognition_network.1} parent=1 // loop_body
      %s21 = ssub.s32 %s16, 1
      %s22 = ssub.s32 %s16, 2
      %s23 = sadd.s32 %s16, 1
      %s24 = ssub.s32 %s16, %s23
      %p25 = scmp.eq.s32.totalorder %s24, 0
      %s27 = sadd.s32 %s26, 1
      %s28 = scalar_select %p25, %s26, %s27
      %p31 = pneg %p25
      %p32 = scmp.eq.s32.totalorder %s16, 1
      %p33 = por %p31, %p32
      %p34 = scmp.ne.s32.totalorder %s26, %s29
      %p35 = scmp.eq.s32.totalorder %s16, 0
      %p36 = por %p34, %p35
      %p37 = scmp.ne.s32.totalorder %s26, %s29
      %p38 = scmp.eq.s32.totalorder %s21, 1
      %p39 = por %p37, %p38
      %p40 = scmp.ne.s32.totalorder %s29, %s30
      %p41 = scmp.eq.s32.totalorder %s21, 0
      %p42 = por %p40, %p41
      %p43 = scmp.ne.s32.totalorder %s29, %s30
      %p44 = scmp.eq.s32.totalorder %s22, 1
      %p45 = por %p43, %p44
      %p47 = scmp.ne.s32.totalorder %s30, %s46
      %p48 = scmp.eq.s32.totalorder %s22, 0
      %p49 = por %p47, %p48
      %s51 = sadd.s32 %s50, 1
      %p54 = scmp.eq.s32.totalorder %s16, 1
      %p55 = scmp.ne.s32.totalorder %s50, %s52
      %p56 = scmp.eq.s32.totalorder %s16, 0
      %p57 = por %p55, %p56
      %p58 = scmp.ne.s32.totalorder %s50, %s52
      %p59 = scmp.eq.s32.totalorder %s21, 1
      %p60 = por %p58, %p59
      %p61 = scmp.ne.s32.totalorder %s52, %s53
      %p62 = scmp.eq.s32.totalorder %s21, 0
      %p63 = por %p61, %p62
      %p64 = scmp.ne.s32.totalorder %s52, %s53
      %p65 = scmp.eq.s32.totalorder %s22, 1
      %p66 = por %p64, %p65
      %p68 = scmp.ne.s32.totalorder %s53, %s67
      %p69 = scmp.eq.s32.totalorder %s22, 0
      %p70 = por %p68, %p69
      %s72 = sadd.s32 %s71, 1
      %p75 = scmp.eq.s32.totalorder %s16, 1
      %p76 = scmp.ne.s32.totalorder %s71, %s73
      %p77 = scmp.eq.s32.totalorder %s16, 0
      %p78 = por %p76, %p77
      %p79 = scmp.ne.s32.totalorder %s71, %s73
      %p80 = scmp.eq.s32.totalorder %s21, 1
      %p81 = por %p79, %p80
      %p82 = scmp.ne.s32.totalorder %s73, %s74
      %p83 = scmp.eq.s32.totalorder %s21, 0
      %p84 = por %p82, %p83
      %p85 = scmp.ne.s32.totalorder %s73, %s74
      %p86 = scmp.eq.s32.totalorder %s22, 1
      %p87 = por %p85, %p86
      %p89 = scmp.ne.s32.totalorder %s74, %s88
      %p90 = scmp.eq.s32.totalorder %s22, 0
      %p91 = por %p89, %p90
      %s93 = sadd.s32 %s92, 1
      %p96 = scmp.eq.s32.totalorder %s16, 1
      %p97 = scmp.ne.s32.totalorder %s92, %s94
      %p98 = scmp.eq.s32.totalorder %s16, 0
      %p99 = por %p97, %p98
      %p100 = scmp.ne.s32.totalorder %s92, %s94
      %p101 = scmp.eq.s32.totalorder %s21, 1
      %p102 = por %p100, %p101
      %p103 = scmp.ne.s32.totalorder %s94, %s95
      %p104 = scmp.eq.s32.totalorder %s21, 0
      %p105 = por %p103, %p104
      %p106 = scmp.ne.s32.totalorder %s94, %s95
      %p107 = scmp.eq.s32.totalorder %s22, 1
      %p108 = por %p106, %p107
      %p110 = scmp.ne.s32.totalorder %s95, %s109
      %p111 = scmp.eq.s32.totalorder %s22, 0
      %p112 = por %p110, %p111
      %s114 = sadd.s32 %s113, 1
      %p117 = scmp.eq.s32.totalorder %s16, 1
      %p118 = scmp.ne.s32.totalorder %s113, %s115
      %p119 = scmp.eq.s32.totalorder %s16, 0
      %p120 = por %p118, %p119
      %p121 = scmp.ne.s32.totalorder %s113, %s115
      %p122 = scmp.eq.s32.totalorder %s21, 1
      %p123 = por %p121, %p122
      %p124 = scmp.ne.s32.totalorder %s115, %s116
      %p125 = scmp.eq.s32.totalorder %s21, 0
      %p126 = por %p124, %p125
      %p127 = scmp.ne.s32.totalorder %s115, %s116
      %p128 = scmp.eq.s32.totalorder %s22, 1
      %p129 = por %p127, %p128
      %p131 = scmp.ne.s32.totalorder %s116, %s130
      %p132 = scmp.eq.s32.totalorder %s22, 0
      %p133 = por %p131, %p132
      %s135 = sadd.s32 %s134, 1
      %p138 = scmp.eq.s32.totalorder %s16, 1
      %p139 = scmp.ne.s32.totalorder %s134, %s136
      %p140 = scmp.eq.s32.totalorder %s16, 0
      %p141 = por %p139, %p140
      %p142 = scmp.ne.s32.totalorder %s134, %s136
      %p143 = scmp.eq.s32.totalorder %s21, 1
      %p144 = por %p142, %p143
      %p145 = scmp.ne.s32.totalorder %s136, %s137
      %p146 = scmp.eq.s32.totalorder %s21, 0
      %p147 = por %p145, %p146
      %p148 = scmp.ne.s32.totalorder %s136, %s137
      %p149 = scmp.eq.s32.totalorder %s22, 1
      %p150 = por %p148, %p149
      %p152 = scmp.ne.s32.totalorder %s137, %s151
      %p153 = scmp.eq.s32.totalorder %s22, 0
      %p154 = por %p152, %p153
      %s156 = sadd.s32 %s155, 1
      %p159 = scmp.eq.s32.totalorder %s16, 1
      %p160 = scmp.ne.s32.totalorder %s155, %s157
      %p161 = scmp.eq.s32.totalorder %s16, 0
      %p162 = por %p160, %p161
      %p163 = scmp.ne.s32.totalorder %s155, %s157
      %p164 = scmp.eq.s32.totalorder %s21, 1
      %p165 = por %p163, %p164
      %p166 = scmp.ne.s32.totalorder %s157, %s158
      %p167 = scmp.eq.s32.totalorder %s21, 0
      %p168 = por %p166, %p167
      %p169 = scmp.ne.s32.totalorder %s157, %s158
      %p170 = scmp.eq.s32.totalorder %s22, 1
      %p171 = por %p169, %p170
      %p173 = scmp.ne.s32.totalorder %s158, %s172
      %p174 = scmp.eq.s32.totalorder %s22, 0
      %p175 = por %p173, %p174
      %s176 = ssub.s32 %s16, %s23
      %p177 = scmp.eq.s32.totalorder %s176, 0
      %s179 = sadd.s32 %s178, 1
      %s180 = scalar_select %p177, %s178, %s179
      %p183 = pneg %p177
      %p184 = scmp.eq.s32.totalorder %s16, 1
      %p185 = por %p183, %p184
      %p186 = scmp.ne.s32.totalorder %s178, %s181
      %p187 = scmp.eq.s32.totalorder %s16, 0
      %p188 = por %p186, %p187
      %p189 = scmp.ne.s32.totalorder %s178, %s181
      %p190 = scmp.eq.s32.totalorder %s21, 1
      %p191 = por %p189, %p190
      %p192 = scmp.ne.s32.totalorder %s181, %s182
      %p193 = scmp.eq.s32.totalorder %s21, 0
      %p194 = por %p192, %p193
      %p195 = scmp.ne.s32.totalorder %s181, %s182
      %p196 = scmp.eq.s32.totalorder %s22, 1
      %p197 = por %p195, %p196
      %p199 = scmp.ne.s32.totalorder %s182, %s198
      %p200 = scmp.eq.s32.totalorder %s22, 0
      %p201 = por %p199, %p200
      %p202 = scmp.le.s32.totalorder 1, %s16
      %p203 = scmp.lt.s32.totalorder %s16, 3
      %p204 = pnand %p202, %p203
      %p205 = pneg %p204
      // Predicated region
      $region9: #{phoneme_recognition_network.1} parent=5 // pred_check
        _
      $region10: #{phoneme_recognition_network.1} parent=5 // pred_check_branch
        %207 = sbr.rel (%p204) target = $region12
      $region11: #{phoneme_recognition_network.1} parent=5 // pred_region
        %s208 = ssub.s32 %s16, 1
        // Predicated region
        $region13: #{phoneme_recognition_network.1} parent=11 // pred_check
          %p209 = pneg %p63
        $region14: #{phoneme_recognition_network.1} parent=11 // pred_check_branch
          %211 = sbr.rel (%p209) target = $region16
        $region15: #{phoneme_recognition_network.1} parent=11 // pred_region
          _
        $region16: #{phoneme_recognition_network.1} parent=11 // pred_fallthru
          _
        // Predicated region
        $region17: #{phoneme_recognition_network.1} parent=11 // pred_check
          %p212 = pneg %p84
        $region18: #{phoneme_recognition_network.1} parent=11 // pred_check_branch
          %214 = sbr.rel (%p212) target = $region20
        $region19: #{phoneme_recognition_network.1} parent=11 // pred_region
          _
        $region20: #{phoneme_recognition_network.1} parent=11 // pred_fallthru
          _
        // Predicated region
        $region21: #{phoneme_recognition_network.1} parent=11 // pred_check
          %p215 = pneg %p105
        $region22: #{phoneme_recognition_network.1} parent=11 // pred_check_branch
          %217 = sbr.rel (%p215) target = $region24
        $region23: #{phoneme_recognition_network.1} parent=11 // pred_region
          _
        $region24: #{phoneme_recognition_network.1} parent=11 // pred_fallthru
          _
        // Predicated region
        $region25: #{phoneme_recognition_network.1} parent=11 // pred_check
          %p218 = pneg %p126
        $region26: #{phoneme_recognition_network.1} parent=11 // pred_check_branch
          %220 = sbr.rel (%p218) target = $region28
        $region27: #{phoneme_recognition_network.1} parent=11 // pred_region
          _
        $region28: #{phoneme_recognition_network.1} parent=11 // pred_fallthru
          _
        // Predicated region
        $region29: #{phoneme_recognition_network.1} parent=11 // pred_check
          %p221 = pneg %p147
        $region30: #{phoneme_recognition_network.1} parent=11 // pred_check_branch
          %223 = sbr.rel (%p221) target = $region32
        $region31: #{phoneme_recognition_network.1} parent=11 // pred_region
          _
        $region32: #{phoneme_recognition_network.1} parent=11 // pred_fallthru
          _
        // Predicated region
        $region33: #{phoneme_recognition_network.1} parent=11 // pred_check
          %p224 = pneg %p168
        $region34: #{phoneme_recognition_network.1} parent=11 // pred_check_branch
          %226 = sbr.rel (%p224) target = $region36
        $region35: #{phoneme_recognition_network.1} parent=11 // pred_region
          _
        $region36: #{phoneme_recognition_network.1} parent=11 // pred_fallthru
          _
      $region12: #{phoneme_recognition_network.1} parent=5 // pred_fallthru
        _
      %p227 = scmp.lt.s32.totalorder %s16, 2
      // Predicated region
      $region37: #{phoneme_recognition_network.1} parent=5 // pred_check
        %p228 = pneg %p227
      $region38: #{phoneme_recognition_network.1} parent=5 // pred_check_branch
        %230 = sbr.rel (%p228) target = $region40
      $region39: #{phoneme_recognition_network.1} parent=5 // pred_region
        // Predicated region
        $region41: #{phoneme_recognition_network.1} parent=39 // pred_check
          %p231 = pneg %p36
        $region42: #{phoneme_recognition_network.1} parent=39 // pred_check_branch
          %233 = sbr.rel (%p231) target = $region44
        $region43: #{phoneme_recognition_network.1} parent=39 // pred_region
          %p234 = scmp.lt.s32.totalorder %s16, 1
          %s235 = scalar_select %p234, %s16, 1
          %s236 = smul.addr %s235, 8
          %s237 = scalar_lea.vmem %s0, %s236
        $region44: #{phoneme_recognition_network.1} parent=39 // pred_fallthru
          _
      $region40: #{phoneme_recognition_network.1} parent=5 // pred_fallthru
        _
      %p238 = scmp.le.s32.totalorder 1, %s16
      %p239 = scmp.lt.s32.totalorder %s16, 3
      %p240 = pnand %p238, %p239
      %p241 = pneg %p240
      // Predicated region
      $region45: #{phoneme_recognition_network.1} parent=5 // pred_check
        _
      $region46: #{phoneme_recognition_network.1} parent=5 // pred_check_branch
        %243 = sbr.rel (%p240) target = $region48
      $region47: #{phoneme_recognition_network.1} parent=5 // pred_region
        %s244 = ssub.s32 %s16, 1
        %p245 = scmp.lt.s32.totalorder %s21, 1
        %s246 = scalar_select %p245, %s21, 1
        %s247 = smul.addr %s246, 8
        %s248 = scalar_lea.vmem %s0, %s247
        %p249 = pneg %p42
        %p250 = pneg %p39
        %p251 = pneg %p63
        %p252 = pneg %p60
        %p253 = pneg %p84
        %p254 = pneg %p81
        %p255 = pneg %p105
        %p256 = pneg %p102
        %p257 = pneg %p126
        %p258 = pneg %p123
        %p259 = pneg %p147
        %p260 = pneg %p144
        %p261 = pneg %p168
        %p262 = pneg %p165
        %p263 = pneg %p194
        %p264 = pneg %p191
        %s265 = sand.u32 %s181, 1
        %s266 = scalar_lea.sflag [#allocation3], %s265
        %s267 = sand.u32 %s181, 1
        %s268 = smul.addr %s267, 8
        %s269 = scalar_lea.vmem [#allocation2], %s268
        %p270 = scmp.lt.s32.totalorder %s21, 1
        %s271 = scalar_select %p270, %s21, 1
        %s272 = smul.addr %s271, 8
        %s273 = scalar_lea.vmem %s0, %s272
        %v275 = vld [vmem:[%s273] sm:$0xff]
        %v276 = vpack.c.bf16 %v275, %v275
        %v277 = vld [vmem:[%s1] sm:$0xf]
        %v278 = vld [vmem:[%s1 + $0x4] sm:$0xf]
        %v279 = vld [vmem:[%s1 + $0x8] sm:$0xf]
        %v280 = vld [vmem:[%s1 + $0xc] sm:$0xf]
        %v281 = vld [vmem:[%s2] sm:$0x1]
        %v283 = vlaneseq
        %v284 = vshrl.u32 %v283, 7
        %v285 = vsub.s32 0, %v284
        %v286 = vrot.slane %v281, %v285
        %v292 = vunpack.c.l.b16 %v277
        %v293 = vunpack.c.l.b16 %v278
        %v294 = vunpack.c.l.b16 %v279
        %v295 = vunpack.c.l.b16 %v280
        %v296 = vpack.c.b16 %v293, %v292
        %v297 = vpack.c.b16 %v295, %v294
        %vm300 = vcmask 261120
        %v302 = vsel %vm300, %v276, 0
        %304 = vmatprep.subr.bf16.mxu0 0
        %305 = vmatpush1.bf16.msra.mxu0 %v296
        %306 = vmatprep.subr.bf16.mxu0 0
        %307 = vmatpush1.bf16.msra.mxu0 %v297
        %308 = vmatprep.subr.bf16.mxu0 0
        %309 = vmatpush1.bf16.msra.mxu0 0
        %310 = vmatprep.subr.bf16.mxu0 0
        %311 = vmatpush1.bf16.msra.mxu0 0
        %312 = vmatprep.subr.bf16.mxu0 0
        %313 = vmatpush1.bf16.msra.mxu0 0
        %314 = vmatprep.subr.bf16.mxu0 0
        %315 = vmatpush1.bf16.msra.mxu0 0
        %316 = vmatprep.subr.bf16.mxu0 0
        %317 = vmatpush1.bf16.msra.mxu0 0
        %318 = vmatprep.subr.bf16.mxu0 0
        %319 = vmatpush1.bf16.msra.mxu0 0
        %320 = vmatprep.subr.bf16.mxu0 0
        %321 = vmatpush1.bf16.msra.mxu0 0
        %322 = vmatprep.subr.bf16.mxu0 0
        %323 = vmatpush1.bf16.msra.mxu0 0
        %324 = vmatprep.subr.bf16.mxu0 0
        %325 = vmatpush1.bf16.msra.mxu0 0
        %326 = vmatprep.subr.bf16.mxu0 0
        %327 = vmatpush1.bf16.msra.mxu0 0
        %328 = vmatprep.subr.bf16.mxu0 0
        %329 = vmatpush1.bf16.msra.mxu0 0
        %330 = vmatprep.subr.bf16.mxu0 0
        %331 = vmatpush1.bf16.msra.mxu0 0
        %332 = vmatprep.subr.bf16.mxu0 0
        %333 = vmatpush1.bf16.msra.mxu0 0
        %334 = vmatprep.subr.bf16.mxu0 0
        %335 = vmatpush1.bf16.msra.mxu0 0
        %336 = vmatprep.mubr.bf16.mxu0 0
        %337 = vmatmul.mubr.bf16.gmra.mrb[0].mxu0 %v302
        %v338 = vpop.f32.mrb[0].mxu0
        %v339 = vadd.f32 %v286, %v338
        %v340 = vpop.f32.mrb[0].mxu0
        %v341 = vpop.f32.mrb[0].mxu0
        %v342 = vpop.f32.mrb[0].mxu0
        %343 = vdwg.mxu0
        %v344 = vmax.f32 %v339, 0.0
        %v345 = vpack.c.bf16 %v344, %v344
        %v346 = vld [vmem:[%s3] sm:$0xf]
        %v347 = vld [vmem:[%s3 + $0x4] sm:$0xf]
        %v348 = vld [vmem:[%s3 + $0x8] sm:$0xf]
        %v349 = vld [vmem:[%s3 + $0xc] sm:$0xf]
        %v350 = vld [vmem:[%s4] sm:$0x1]
        %v352 = vlaneseq
        %v353 = vshrl.u32 %v352, 7
        %v354 = vsub.s32 0, %v353
        %v355 = vrot.slane %v350, %v354
        %v361 = vunpack.c.l.b16 %v346
        %v362 = vunpack.c.l.b16 %v347
        %v363 = vunpack.c.l.b16 %v348
        %v364 = vunpack.c.l.b16 %v349
        %v365 = vpack.c.b16 %v362, %v361
        %v366 = vpack.c.b16 %v364, %v363
        %v370 = vsel %vm300, %v345, 0
        %372 = vmatprep.subr.bf16.mxu0 0
        %373 = vmatpush1.bf16.msra.mxu0 %v365
        %374 = vmatprep.subr.bf16.mxu0 0
        %375 = vmatpush1.bf16.msra.mxu0 %v366
        %376 = vmatprep.subr.bf16.mxu0 0
        %377 = vmatpush1.bf16.msra.mxu0 0
        %378 = vmatprep.subr.bf16.mxu0 0
        %379 = vmatpush1.bf16.msra.mxu0 0
        %380 = vmatprep.subr.bf16.mxu0 0
        %381 = vmatpush1.bf16.msra.mxu0 0
        %382 = vmatprep.subr.bf16.mxu0 0
        %383 = vmatpush1.bf16.msra.mxu0 0
        %384 = vmatprep.subr.bf16.mxu0 0
        %385 = vmatpush1.bf16.msra.mxu0 0
        %386 = vmatprep.subr.bf16.mxu0 0
        %387 = vmatpush1.bf16.msra.mxu0 0
        %388 = vmatprep.subr.bf16.mxu0 0
        %389 = vmatpush1.bf16.msra.mxu0 0
        %390 = vmatprep.subr.bf16.mxu0 0
        %391 = vmatpush1.bf16.msra.mxu0 0
        %392 = vmatprep.subr.bf16.mxu0 0
        %393 = vmatpush1.bf16.msra.mxu0 0
        %394 = vmatprep.subr.bf16.mxu0 0
        %395 = vmatpush1.bf16.msra.mxu0 0
        %396 = vmatprep.subr.bf16.mxu0 0
        %397 = vmatpush1.bf16.msra.mxu0 0
        %398 = vmatprep.subr.bf16.mxu0 0
        %399 = vmatpush1.bf16.msra.mxu0 0
        %400 = vmatprep.subr.bf16.mxu0 0
        %401 = vmatpush1.bf16.msra.mxu0 0
        %402 = vmatprep.subr.bf16.mxu0 0
        %403 = vmatpush1.bf16.msra.mxu0 0
        %404 = vmatprep.mubr.bf16.mxu0 0
        %405 = vmatmul.mubr.bf16.gmra.mrb[0].mxu0 %v370
        %v406 = vpop.f32.mrb[0].mxu0
        %v407 = vadd.f32 %v355, %v406
        %v408 = vpop.f32.mrb[0].mxu0
        %v409 = vpop.f32.mrb[0].mxu0
        %v410 = vpop.f32.mrb[0].mxu0
        %411 = vdwg.mxu0
        %v412 = vmax.f32 %v407, 0.0
        %v413 = vpack.c.bf16 %v412, %v412
        %v414 = vld [vmem:[%s5] sm:$0xf]
        %v415 = vld [vmem:[%s5 + $0x4] sm:$0xf]
        %v416 = vld [vmem:[%s5 + $0x8] sm:$0xf]
        %v417 = vld [vmem:[%s5 + $0xc] sm:$0xf]
        %v418 = vld [vmem:[%s6] sm:$0x1]
        %v420 = vlaneseq
        %v421 = vshrl.u32 %v420, 7
        %v422 = vsub.s32 0, %v421
        %v423 = vrot.slane %v418, %v422
        %v429 = vunpack.c.l.b16 %v414
        %v430 = vunpack.c.l.b16 %v415
        %v431 = vunpack.c.l.b16 %v416
        %v432 = vunpack.c.l.b16 %v417
        %v433 = vpack.c.b16 %v430, %v429
        %v434 = vpack.c.b16 %v432, %v431
        %v438 = vsel %vm300, %v413, 0
        %440 = vmatprep.subr.bf16.mxu0 0
        %441 = vmatpush1.bf16.msra.mxu0 %v433
        %442 = vmatprep.subr.bf16.mxu0 0
        %443 = vmatpush1.bf16.msra.mxu0 %v434
        %444 = vmatprep.subr.bf16.mxu0 0
        %445 = vmatpush1.bf16.msra.mxu0 0
        %446 = vmatprep.subr.bf16.mxu0 0
        %447 = vmatpush1.bf16.msra.mxu0 0
        %448 = vmatprep.subr.bf16.mxu0 0
        %449 = vmatpush1.bf16.msra.mxu0 0
        %450 = vmatprep.subr.bf16.mxu0 0
        %451 = vmatpush1.bf16.msra.mxu0 0
        %452 = vmatprep.subr.bf16.mxu0 0
        %453 = vmatpush1.bf16.msra.mxu0 0
        %454 = vmatprep.subr.bf16.mxu0 0
        %455 = vmatpush1.bf16.msra.mxu0 0
        %456 = vmatprep.subr.bf16.mxu0 0
        %457 = vmatpush1.bf16.msra.mxu0 0
        %458 = vmatprep.subr.bf16.mxu0 0
        %459 = vmatpush1.bf16.msra.mxu0 0
        %460 = vmatprep.subr.bf16.mxu0 0
        %461 = vmatpush1.bf16.msra.mxu0 0
        %462 = vmatprep.subr.bf16.mxu0 0
        %463 = vmatpush1.bf16.msra.mxu0 0
        %464 = vmatprep.subr.bf16.mxu0 0
        %465 = vmatpush1.bf16.msra.mxu0 0
        %466 = vmatprep.subr.bf16.mxu0 0
        %467 = vmatpush1.bf16.msra.mxu0 0
        %468 = vmatprep.subr.bf16.mxu0 0
        %469 = vmatpush1.bf16.msra.mxu0 0
        %470 = vmatprep.subr.bf16.mxu0 0
        %471 = vmatpush1.bf16.msra.mxu0 0
        %472 = vmatprep.mubr.bf16.mxu0 0
        %473 = vmatmul.mubr.bf16.gmra.mrb[0].mxu0 %v438
        %v474 = vpop.f32.mrb[0].mxu0
        %v475 = vadd.f32 %v423, %v474
        %v476 = vpop.f32.mrb[0].mxu0
        %v477 = vpop.f32.mrb[0].mxu0
        %v478 = vpop.f32.mrb[0].mxu0
        %479 = vdwg.mxu0
        %vm480 = vcmask 392192
        %481 = vst.msk [vmem:[%s269] sm:$0xff] %vm480, %v475
        %s482 = sand.u32 %s181, 1
        %s483 = scalar_lea.sflag [#allocation3], %s482
        %s484 = sand.u32 %s181, 1
        %s485 = smul.addr %s484, 8
        %s486 = scalar_lea.vmem [#allocation2], %s485
        // Predicated region
        $region49: #{phoneme_recognition_network.1} parent=47 // pred_check
          %p487 = pneg %p191
        $region50: #{phoneme_recognition_network.1} parent=47 // pred_check_branch
          %489 = sbr.rel (%p487) target = $region52
        $region51: #{phoneme_recognition_network.1} parent=47 // pred_region
          %s491 = ssub.s32 128, 128
          %492 = vsyncadd %s483, %s491
          %s493 = smul.addr %s21, 128
          %s494 = scalar_lea.hbm %s7, %s493
          %s496 = sshll.u32 %s486, 4
          %s497 = int_to_ptr.vmem [resolvable:$true] %s496
          %499 = dma.vmem_to_hbm [thread:$0]  %s497, 128, %s494, %s483
        $region52: #{phoneme_recognition_network.1} parent=47 // pred_fallthru
          _
      $region48: #{phoneme_recognition_network.1} parent=5 // pred_fallthru
        _
      %p500 = scmp.le.s32.totalorder 2, %s16
      // Predicated region
      $region53: #{phoneme_recognition_network.1} parent=5 // pred_check
        %p501 = pneg %p500
      $region54: #{phoneme_recognition_network.1} parent=5 // pred_check_branch
        %503 = sbr.rel (%p501) target = $region56
      $region55: #{phoneme_recognition_network.1} parent=5 // pred_region
        %s504 = ssub.s32 %s16, 2
        // Predicated region
        $region57: #{phoneme_recognition_network.1} parent=55 // pred_check
          %p505 = pneg %p197
        $region58: #{phoneme_recognition_network.1} parent=55 // pred_check_branch
          %507 = sbr.rel (%p505) target = $region60
        $region59: #{phoneme_recognition_network.1} parent=55 // pred_region
          %s508 = sand.u32 %s182, 1
          %s509 = scalar_lea.sflag [#allocation3], %s508
          %s510 = sand.u32 %s182, 1
          %s511 = smul.addr %s510, 8
          %s512 = scalar_lea.vmem [#allocation2], %s511
          %513 = dma.done %s509, 128
        $region60: #{phoneme_recognition_network.1} parent=55 // pred_fallthru
          _
      $region56: #{phoneme_recognition_network.1} parent=5 // pred_fallthru
        _
    $region6: #{phoneme_recognition_network.1} parent=1 // loop_footer
      %s20 = sadd.s32 1, %s16
    $region7: #{phoneme_recognition_network.1} parent=1 // loop_footer_branch
      %15 = sbr.rel target = $region3
    $region8: #{phoneme_recognition_network.1} parent=1 // loop_exit
      _
    %514 = vsyncpa [#allocation3], 1
    %s515 = scalar_lea.sflag [#allocation3], 1
    %516 = vsyncpa %s515, 1

</llo_original>
